<compile_context>
chip_gen: v5e
topology: v5e:2x2
jax: 0.10.0
libtpu: 0.0.40
codegen_flags: <defaults>
</compile_context>

<pallas_src>
import jax
import jax.numpy as jnp
from jax.experimental import pallas as pl
from jax.experimental.pallas import tpu as pltpu

IN_SIZE, HID_SIZE, OUT_SIZE = 8, 24, 4   # logical model sizes
SUBLANE = 8                              # f32 sublane width
HID_P = 128                              # hidden dim padded to one lane group


def _round_up(n, m):
    return (n + m - 1) // m * m


def mlp_kernel(x_ref, w1_ref, b1_ref, w2_ref, b2_ref, o_ref):
    x = x_ref[...]                                                     # (tb, 8)  f32
    h = jnp.dot(x, w1_ref[...], preferred_element_type=jnp.float32)    # (tb, 128)
    h = jnp.maximum(h + b1_ref[...], 0.0)
    y = jnp.dot(h, w2_ref[...], preferred_element_type=jnp.float32)    # (tb, 4)
    o_ref[...] = y + b2_ref[...]


def pad_params(w1, b1, w2, b2):
    """Pad only the hidden dimension (24 -> 128); exact w.r.t. the reference."""
    in_f, hid = w1.shape
    out_f = w2.shape[1]
    w1p = jnp.zeros((in_f, HID_P), jnp.float32).at[:, :hid].set(w1.astype(jnp.float32))
    b1p = jnp.zeros((1, HID_P), jnp.float32).at[:, :hid].set(
        b1.astype(jnp.float32).reshape(1, hid))
    w2p = jnp.zeros((HID_P, out_f), jnp.float32).at[:hid, :].set(w2.astype(jnp.float32))
    b2p = b2.astype(jnp.float32).reshape(1, out_f)
    return w1p, b1p, w2p, b2p


def mlp_forward(x, padded_params, *, tile_b=2048):
    """x: (B, IN_SIZE) f32; padded_params from pad_params()."""
    w1p, b1p, w2p, b2p = padded_params
    B, in_f = x.shape
    assert in_f == IN_SIZE

    # Pad the batch to a sublane multiple only (<= 7 extra rows, negligible);
    # no lane padding of the features at all.
    Bp = _round_up(B, SUBLANE)
    xp = x if Bp == B else jnp.pad(x, ((0, Bp - B), (0, 0)))

    # Batch tile: multiple of 8 sublanes, at most ceil(Bp/2) so the grid has
    # >=2 steps whenever possible (v7x megacore), capped by tile_b.
    half = _round_up((Bp + 1) // 2, SUBLANE)
    tb = max(SUBLANE, min(_round_up(tile_b, SUBLANE), half))
    n_tiles = pl.cdiv(Bp, tb)

    # Logical (unpadded) work for XLA's scheduler.
    flops = 2 * B * (IN_SIZE * HID_SIZE + HID_SIZE * OUT_SIZE)
    bytes_accessed = (
        B * IN_SIZE * 4 + B * OUT_SIZE * 4
        + sum(int(p.size) * 4 for p in (w1p, b1p, w2p, b2p)))

    out = pl.pallas_call(
        mlp_kernel,
        out_shape=jax.ShapeDtypeStruct((Bp, OUT_SIZE), jnp.float32),
        grid_spec=pltpu.PrefetchScalarGridSpec(
            num_scalar_prefetch=0,
            grid=(n_tiles,),
            in_specs=[
                pl.BlockSpec((tb, IN_SIZE), lambda i: (i, 0)),      # x tile (narrow)
                pl.BlockSpec((IN_SIZE, HID_P), lambda i: (0, 0)),   # w1 (resident)
                pl.BlockSpec((1, HID_P), lambda i: (0, 0)),         # b1 (resident)
                pl.BlockSpec((HID_P, OUT_SIZE), lambda i: (0, 0)),  # w2 (resident)
                pl.BlockSpec((1, OUT_SIZE), lambda i: (0, 0)),      # b2 (resident)
            ],
            out_specs=pl.BlockSpec((tb, OUT_SIZE), lambda i: (i, 0)),
        ),
        compiler_params=pltpu.CompilerParams(
            dimension_semantics=("parallel",),   # lets v7x use both TCs
        ),
        cost_estimate=pl.CostEstimate(
            flops=flops, transcendentals=0, bytes_accessed=bytes_accessed),
    )(xp, w1p, b1p, w2p, b2p)

    return out if Bp == B else out[:B]


def init_params(key, input_size=IN_SIZE, hidden_size=HID_SIZE,
                output_size=OUT_SIZE):
    """PyTorch nn.Linear-style init, weights stored as (in, out) = W.T."""
    k1, k2, k3, k4 = jax.random.split(key, 4)
    bound1 = 1.0 / jnp.sqrt(input_size)
    bound2 = 1.0 / jnp.sqrt(hidden_size)
    w1 = jax.random.uniform(k1, (input_size, hidden_size), jnp.float32,
                            -bound1, bound1)
    b1 = jax.random.uniform(k2, (1, hidden_size), jnp.float32, -bound1, bound1)
    w2 = jax.random.uniform(k3, (hidden_size, output_size), jnp.float32,
                            -bound2, bound2)
    b2 = jax.random.uniform(k4, (1, output_size), jnp.float32, -bound2, bound2)
    return w1, b1, w2, b2


def _reference(x, w1, b1, w2, b2):
    return jnp.maximum(x @ w1 + b1, 0.0) @ w2 + b2


if __name__ == "__main__":
    key = jax.random.PRNGKey(0)
    k_x, k_p, k_b1, k_b2 = jax.random.split(key, 4)

    w1, b1, w2, b2 = init_params(k_p)
    padded = pad_params(w1, b1, w2, b2)

    # --- small case matching the module (batch=2, in=8 -> out=4) ---
    x = jax.random.normal(k_x, (2, IN_SIZE), jnp.float32)
    out = jax.block_until_ready(jax.jit(mlp_forward)(x, padded))
    ref = _reference(x, w1, b1, w2, b2)
    assert out.shape == (2, OUT_SIZE)
    assert jnp.allclose(out, ref, atol=1e-2, rtol=1e-2)

    # --- batched GA-population case: >=2 grid steps ---
    xb = jax.random.normal(k_b1, (300, IN_SIZE), jnp.float32)
    outb = jax.block_until_ready(mlp_forward(xb, padded))
    refb = _reference(xb, w1, b1, w2, b2)
    assert outb.shape == (300, OUT_SIZE)
    assert jnp.allclose(outb, refb, atol=1e-2, rtol=1e-2)

    # --- non-dividing batch: exercises the masked partial last tile ---
    xc = jax.random.normal(k_b2, (1000, IN_SIZE), jnp.float32)
    outc = jax.block_until_ready(mlp_forward(xc, padded, tile_b=256))
    refc = _reference(xc, w1, b1, w2, b2)
    assert outc.shape == (1000, OUT_SIZE)
    assert jnp.allclose(outc, refc, atol=1e-2, rtol=1e-2)

    print("KERNEL_OK")
</pallas_src>

<mosaic_0001>
module attributes {stable_mosaic.version = 11 : i64} {
  func.func @mlp_kernel(%arg0: i32, %arg1: memref<8x8xf32, #tpu.memory_space<vmem>>, %arg2: memref<8x128xf32, #tpu.memory_space<vmem>>, %arg3: memref<1x128xf32, #tpu.memory_space<vmem>>, %arg4: memref<128x4xf32, #tpu.memory_space<vmem>>, %arg5: memref<1x4xf32, #tpu.memory_space<vmem>>, %arg6: memref<8x4xf32, #tpu.memory_space<vmem>>) attributes {dimension_semantics = [#tpu.dimension_semantics<parallel>], iteration_bounds = array<i64: 1>, scalar_prefetch = 0 : i64, scratch_operands = 0 : i64, tpu.core_type = #tpu.core_type<tc>, window_params = [{transform_indices = @transform_0, window_bounds = array<i64: 8, 8>}, {pipeline_mode = #tpu.pipeline_mode<synchronous>, transform_indices = @transform_1, window_bounds = array<i64: 8, 128>}, {pipeline_mode = #tpu.pipeline_mode<synchronous>, transform_indices = @transform_2, window_bounds = array<i64: 1, 128>}, {pipeline_mode = #tpu.pipeline_mode<synchronous>, transform_indices = @transform_3, window_bounds = array<i64: 128, 4>}, {pipeline_mode = #tpu.pipeline_mode<synchronous>, transform_indices = @transform_4, window_bounds = array<i64: 1, 4>}, {transform_indices = @transform_5, window_bounds = array<i64: 8, 4>}]} {
    %c0 = arith.constant 0 : index
    %c0_0 = arith.constant 0 : index
    %0 = vector.load %arg1[%c0, %c0_0] : memref<8x8xf32, #tpu.memory_space<vmem>>, vector<8x8xf32>
    %c0_1 = arith.constant 0 : index
    %c0_2 = arith.constant 0 : index
    %1 = vector.load %arg2[%c0_1, %c0_2] : memref<8x128xf32, #tpu.memory_space<vmem>>, vector<8x128xf32>
    %cst = arith.constant dense<0.000000e+00> : vector<8x128xf32>
    %2 = tpu.matmul %0, %1, %cst {dimension_numbers = #tpu.dot_dimension_numbers<[1], [0], [0], [1], [0, 0, 1, 1], [], []>} : vector<8x8xf32>, vector<8x128xf32>, vector<8x128xf32> -> vector<8x128xf32>
    %c0_3 = arith.constant 0 : index
    %c0_4 = arith.constant 0 : index
    %3 = vector.load %arg3[%c0_3, %c0_4] : memref<1x128xf32, #tpu.memory_space<vmem>>, vector<1x128xf32>
    %4 = vector.broadcast %3 : vector<1x128xf32> to vector<8x128xf32>
    %5 = arith.addf %2, %4 : vector<8x128xf32>
    %cst_5 = arith.constant 0.000000e+00 : f32
    %6 = vector.broadcast %cst_5 : f32 to vector<8x128xf32>
    %7 = arith.maximumf %5, %6 : vector<8x128xf32>
    %c0_6 = arith.constant 0 : index
    %c0_7 = arith.constant 0 : index
    %8 = vector.load %arg4[%c0_6, %c0_7] : memref<128x4xf32, #tpu.memory_space<vmem>>, vector<128x4xf32>
    %cst_8 = arith.constant dense<0.000000e+00> : vector<8x4xf32>
    %9 = tpu.matmul %7, %8, %cst_8 {dimension_numbers = #tpu.dot_dimension_numbers<[1], [0], [0], [1], [0, 0, 1, 1], [], []>} : vector<8x128xf32>, vector<128x4xf32>, vector<8x4xf32> -> vector<8x4xf32>
    %c0_9 = arith.constant 0 : index
    %c0_10 = arith.constant 0 : index
    %10 = vector.load %arg5[%c0_9, %c0_10] : memref<1x4xf32, #tpu.memory_space<vmem>>, vector<1x4xf32>
    %11 = vector.broadcast %10 : vector<1x4xf32> to vector<8x4xf32>
    %12 = arith.addf %9, %11 : vector<8x4xf32>
    %c0_11 = arith.constant 0 : index
    %c0_12 = arith.constant 0 : index
    %13 = vector.load %arg6[%c0_11, %c0_12] : memref<8x4xf32, #tpu.memory_space<vmem>>, vector<8x4xf32>
    tpu.vector_store %arg6[%c0_11, %c0_12], %12 {strides = array<i32>} : memref<8x4xf32, #tpu.memory_space<vmem>>, vector<8x4xf32>,
    return
  }
  func.func @transform_0(%arg0: i32) -> (i32, i32) {
    %c0_i32 = arith.constant 0 : i32
    %c0_i32_0 = arith.constant 0 : i32
    return %arg0, %c0_i32 : i32, i32
  }
  func.func @transform_1(%arg0: i32) -> (i32, i32) {
    %c0_i32 = arith.constant 0 : i32
    %c0_i32_0 = arith.constant 0 : i32
    %c0_i32_1 = arith.constant 0 : i32
    return %c0_i32, %c0_i32_0 : i32, i32
  }
  func.func @transform_2(%arg0: i32) -> (i32, i32) {
    %c0_i32 = arith.constant 0 : i32
    %c0_i32_0 = arith.constant 0 : i32
    %c0_i32_1 = arith.constant 0 : i32
    return %c0_i32, %c0_i32_0 : i32, i32
  }
  func.func @transform_3(%arg0: i32) -> (i32, i32) {
    %c0_i32 = arith.constant 0 : i32
    %c0_i32_0 = arith.constant 0 : i32
    %c0_i32_1 = arith.constant 0 : i32
    return %c0_i32, %c0_i32_0 : i32, i32
  }
  func.func @transform_4(%arg0: i32) -> (i32, i32) {
    %c0_i32 = arith.constant 0 : i32
    %c0_i32_0 = arith.constant 0 : i32
    %c0_i32_1 = arith.constant 0 : i32
    return %c0_i32, %c0_i32_0 : i32, i32
  }
  func.func @transform_5(%arg0: i32) -> (i32, i32) {
    %c0_i32 = arith.constant 0 : i32
    %c0_i32_0 = arith.constant 0 : i32
    return %arg0, %c0_i32 : i32, i32
  }
}

</mosaic_0001>

<llo_original>
// kernel: mlp_forward.1
$region0: #{mlp_forward.1}
  #allocation0 [shape = 'u32[]', space=smem, size = 0x4, offset = 0x4, fixed_abs, tag = 'smem constant byte address 0x4 - core index']
  #allocation1 [shape = 'u32[72,128]{1,0:T(1,128)}', space=vmem, size = 0x9000, scoped, tag = 'internal scratch']
  %s0 = inlined_call_operand.vmem [shape: f32[8,8], index: 0, kind: input, shape index: {}]
  %s1 = inlined_call_operand.vmem [shape: f32[8,128], index: 1, kind: input, shape index: {}]
  %s2 = inlined_call_operand.vmem [shape: f32[1,128], index: 2, kind: input, shape index: {}]
  %s3 = inlined_call_operand.vmem [shape: f32[128,4], index: 3, kind: input, shape index: {}]
  %s4 = inlined_call_operand.vmem [shape: f32[1,4], index: 4, kind: input, shape index: {}]
  %s5 = inlined_call_operand.vmem [shape: f32[8,4], index: 5, kind: output, shape index: {}]
  %s6 = sld [smem:[#allocation0]]
  $region30: #{mlp_forward.1} parent=0
    _
  %s8 = ssub.s32 1, %s6
  %s9 = scalar_select 0, %s8, %s6
  // Predicated region
  $region2: #{mlp_forward.1} parent=0 // pred_check
    _
  $region3: #{mlp_forward.1} parent=0 // pred_check_branch
    %11 = sbr.rel (0) target = $region5
  $region4: #{mlp_forward.1} parent=0 // pred_region
    _
  $region5: #{mlp_forward.1} parent=0 // pred_fallthru
    _
  // Predicated region
  $region6: #{mlp_forward.1} parent=0 // pred_check
    _
  $region7: #{mlp_forward.1} parent=0 // pred_check_branch
    %13 = sbr.rel (0) target = $region9
  $region8: #{mlp_forward.1} parent=0 // pred_region
    _
  $region9: #{mlp_forward.1} parent=0 // pred_fallthru
    _
  // Predicated region
  $region10: #{mlp_forward.1} parent=0 // pred_check
    _
  $region11: #{mlp_forward.1} parent=0 // pred_check_branch
    %15 = sbr.rel (0) target = $region13
  $region12: #{mlp_forward.1} parent=0 // pred_region
    _
  $region13: #{mlp_forward.1} parent=0 // pred_fallthru
    _
  // Predicated region
  $region14: #{mlp_forward.1} parent=0 // pred_check
    _
  $region15: #{mlp_forward.1} parent=0 // pred_check_branch
    %17 = sbr.rel (0) target = $region17
  $region16: #{mlp_forward.1} parent=0 // pred_region
    _
  $region17: #{mlp_forward.1} parent=0 // pred_fallthru
    _
  // Predicated region
  $region18: #{mlp_forward.1} parent=0 // pred_check
    _
  $region19: #{mlp_forward.1} parent=0 // pred_check_branch
    %19 = sbr.rel (0) target = $region21
  $region20: #{mlp_forward.1} parent=0 // pred_region
    _
  $region21: #{mlp_forward.1} parent=0 // pred_fallthru
    _
  %v20 = vld [vmem:[%s0] sm:$0xff]
  %v21 = vld [vmem:[%s1] sm:$0xff]
  %v22 = vld [vmem:[%s2] sm:$0x1]
  %v24 = vperm.slane %v22, 0
  %vm26 = vcmask 64512
  %v28 = vsel %vm26, %v20, 0
  %30 = vmatpush.msra.mxu0 0.0
  %31 = vmatpush.msra.mxu0 0.0
  %32 = vmatpush.msra.mxu0 0.0
  %33 = vmatpush.msra.mxu0 0.0
  %34 = vmatpush.msra.mxu0 0.0
  %35 = vmatpush.msra.mxu0 0.0
  %36 = vmatpush.msra.mxu0 0.0
  %37 = vmatpush.msra.mxu0 0.0
  %38 = vmatpush.msra.mxu0 0.0
  %39 = vmatpush.msra.mxu0 0.0
  %40 = vmatpush.msra.mxu0 0.0
  %41 = vmatpush.msra.mxu0 0.0
  %42 = vmatpush.msra.mxu0 0.0
  %43 = vmatpush.msra.mxu0 0.0
  %44 = vmatpush.msra.mxu0 0.0
  %45 = vmatpush.msra.mxu0 %v21
  %46 = vmatmul.f32.gmra.mxu0 %v28
  %v47 = vpop.f32.mrf.mxu0
  %v48 = vadd.f32 %v24, %v47
  %49 = vdwg.mxu0
  %v50 = vmax.f32 %v48, 0.0
  %v51 = vld [vmem:[%s3] sm:$0xff]
  %v52 = vld [vmem:[%s3 + $0x8] sm:$0xff]
  %v53 = vld [vmem:[%s3 + $0x10] sm:$0xff]
  %v54 = vld [vmem:[%s3 + $0x18] sm:$0xff]
  %v55 = vld [vmem:[%s3 + $0x20] sm:$0xff]
  %v56 = vld [vmem:[%s3 + $0x28] sm:$0xff]
  %v57 = vld [vmem:[%s3 + $0x30] sm:$0xff]
  %v58 = vld [vmem:[%s3 + $0x38] sm:$0xff]
  %v59 = vld [vmem:[%s3 + $0x40] sm:$0xff]
  %v60 = vld [vmem:[%s3 + $0x48] sm:$0xff]
  %v61 = vld [vmem:[%s3 + $0x50] sm:$0xff]
  %v62 = vld [vmem:[%s3 + $0x58] sm:$0xff]
  %v63 = vld [vmem:[%s3 + $0x60] sm:$0xff]
  %v64 = vld [vmem:[%s3 + $0x68] sm:$0xff]
  %v65 = vld [vmem:[%s3 + $0x70] sm:$0xff]
  %v66 = vld [vmem:[%s3 + $0x78] sm:$0xff]
  %v67 = vld [vmem:[%s4] sm:$0x1]
  %v69 = vperm.slane %v67, 0
  %71 = vmatpush.msra.mxu0 %v66
  %72 = vmatpush.msra.mxu0 %v65
  %73 = vmatpush.msra.mxu0 %v64
  %74 = vmatpush.msra.mxu0 %v63
  %75 = vmatpush.msra.mxu0 %v62
  %76 = vmatpush.msra.mxu0 %v61
  %77 = vmatpush.msra.mxu0 %v60
  %78 = vmatpush.msra.mxu0 %v59
  %79 = vmatpush.msra.mxu0 %v58
  %80 = vmatpush.msra.mxu0 %v57
  %81 = vmatpush.msra.mxu0 %v56
  %82 = vmatpush.msra.mxu0 %v55
  %83 = vmatpush.msra.mxu0 %v54
  %84 = vmatpush.msra.mxu0 %v53
  %85 = vmatpush.msra.mxu0 %v52
  %86 = vmatpush.msra.mxu0 %v51
  %87 = vmatmul.f32.gmra.mxu0 %v50
  %v88 = vpop.f32.mrf.mxu0
  %v89 = vadd.f32 %v69, %v88
  %90 = vdwg.mxu0
  %vm91 = vcmask 31744
  %92 = vst.msk [vmem:[%s5] sm:$0xff] %vm91, %v89
  // Predicated region
  $region22: #{mlp_forward.1} parent=0 // pred_check
    _
  $region23: #{mlp_forward.1} parent=0 // pred_check_branch
    %94 = sbr.rel (0) target = $region25
  $region24: #{mlp_forward.1} parent=0 // pred_region
    _
  $region25: #{mlp_forward.1} parent=0 // pred_fallthru
    _
  // Predicated region
  $region26: #{mlp_forward.1} parent=0 // pred_check
    _
  $region27: #{mlp_forward.1} parent=0 // pred_check_branch
    %96 = sbr.rel (0) target = $region29
  $region28: #{mlp_forward.1} parent=0 // pred_region
    _
  $region29: #{mlp_forward.1} parent=0 // pred_fallthru
    _

</llo_original>
